<compile_context>
chip_gen: v7x
topology: tpu7x:2x2x1
jax: 0.10.0
libtpu: 0.0.40
codegen_flags: <defaults>
</compile_context>

<pallas_src>
import functools

import jax
import jax.numpy as jnp
from jax.experimental import pallas as pl
from jax.experimental.pallas import tpu as pltpu


def _conv1x1_relu_kernel(x_ref, w_ref, b_ref, out_ref):
    # x_ref  : (C, HW)  bf16   (one batch element, lane-dense)
    # w_ref  : (F, C)   f32
    # b_ref  : (F, 1)   f32
    # out_ref: (F, HW)  f32
    w = w_ref[...].astype(jnp.bfloat16)            # bf16 MXU inputs, f32 accumulate
    y = jnp.dot(w, x_ref[...], preferred_element_type=jnp.float32) + b_ref[...]
    out_ref[...] = jnp.maximum(y, 0.0)


def _conv1x1_relu_dropout_kernel(x_ref, w_ref, b_ref, bits_ref, out_ref, *, rate):
    # Training mode: fused inverted dropout.
    # Fold scale = 1/(1-rate) into the (tiny) weight/bias tiles instead of a
    # per-output-element multiply; ReLU commutes with a positive scale.
    scale = 1.0 / (1.0 - rate)
    w = (w_ref[...] * scale).astype(jnp.bfloat16)
    b = b_ref[...] * scale
    y = jnp.maximum(
        jnp.dot(w, x_ref[...], preferred_element_type=jnp.float32) + b, 0.0)
    # Integer-domain threshold: keep iff bits < (1-rate) * 2^32.
    threshold = jnp.uint32(min(int(round((1.0 - rate) * 4294967296.0)), 0xFFFFFFFF))
    out_ref[...] = jnp.where(bits_ref[...] < threshold, y, 0.0)


def conv_forward(x, weight, bias, *, rate=0.1, training=False, rng_key=None):
    """Forward pass of the PyTorch `Conv` module.

    x      : [B, C, H, W] float32
    weight : [F, C] float32   (the (F, C, 1, 1) Conv2d kernel squeezed at init)
    bias   : [F]    float32
    returns: [B, F, H, W] float32
    """
    B, C, H, W = x.shape
    F_out = weight.shape[0]
    HW = H * W

    x_bf = x.reshape(B, C, HW).astype(jnp.bfloat16)     # halves input DMA bytes
    b_r = bias.reshape(F_out, 1).astype(jnp.float32)

    out_shape = jax.ShapeDtypeStruct((B, F_out, HW), jnp.float32)

    # grid over the batch; "parallel" shards the two steps across the two
    # TensorCores on v7x (no-op on single-TC v5e/v6e).
    x_spec = pl.BlockSpec((None, C, HW), lambda i: (i, 0, 0))
    w_spec = pl.BlockSpec((F_out, C), lambda i: (0, 0))      # resident across steps
    b_spec = pl.BlockSpec((F_out, 1), lambda i: (0, 0))
    out_spec = pl.BlockSpec((None, F_out, HW), lambda i: (i, 0, 0))
    compiler_params = pltpu.CompilerParams(dimension_semantics=("parallel",))

    flops = 2 * B * F_out * C * HW
    base_bytes = 2 * B * C * HW + 4 * F_out * C + 4 * F_out + 4 * B * F_out * HW

    if (not training) or rate == 0.0:
        out = pl.pallas_call(
            _conv1x1_relu_kernel,
            out_shape=out_shape,
            grid=(B,),
            in_specs=[x_spec, w_spec, b_spec],
            out_specs=out_spec,
            compiler_params=compiler_params,
            cost_estimate=pl.CostEstimate(
                flops=flops, transcendentals=0, bytes_accessed=base_bytes),
        )(x_bf, weight, b_r)
    else:
        if rng_key is None:
            rng_key = jax.random.PRNGKey(0)
        # TODO(synk): the caller must thread a fresh rng_key every training
        # step; a fixed key reuses the same dropout mask across steps.
        bits = jax.random.bits(rng_key, (B, F_out, HW), jnp.uint32)
        bits_spec = pl.BlockSpec((None, F_out, HW), lambda i: (i, 0, 0))
        out = pl.pallas_call(
            functools.partial(_conv1x1_relu_dropout_kernel, rate=rate),
            out_shape=out_shape,
            grid=(B,),
            in_specs=[x_spec, w_spec, b_spec, bits_spec],
            out_specs=out_spec,
            compiler_params=compiler_params,
            cost_estimate=pl.CostEstimate(
                flops=flops, transcendentals=0,
                bytes_accessed=base_bytes + 4 * B * F_out * HW),
        )(x_bf, weight, b_r, bits)

    return out.reshape(B, F_out, H, W)


def _reference(x, weight, bias):
    # Pure-JAX f32 reference of the PyTorch forward (eval mode).
    y = jnp.einsum('oc,bchw->bohw', weight, x) + bias[None, :, None, None]
    return jnp.maximum(y, 0.0)


if __name__ == "__main__":
    # Shapes implied by the module: batch=2, features(channels)=32, 16x16 spatial.
    B, FEATURES, H, W = 2, 32, 16, 16
    DROPOUT = 0.1

    key = jax.random.PRNGKey(0)
    k_w, k_b, k_x, k_drop = jax.random.split(key, 4)

    # Conv2d(features, features, (1,1)) style init bounds.
    bound = 1.0 / (FEATURES ** 0.5)
    weight = jax.random.uniform(k_w, (FEATURES, FEATURES), jnp.float32, -bound, bound)
    bias = jax.random.uniform(k_b, (FEATURES,), jnp.float32, -bound, bound)
    x = jax.random.normal(k_x, (B, FEATURES, H, W), jnp.float32)

    # Eval-mode forward (dropout = identity): compare against f32 reference.
    # Tolerance loosened for the bf16 MXU inputs (accumulation stays f32).
    out = jax.block_until_ready(
        conv_forward(x, weight, bias, rate=DROPOUT, training=False))
    ref = _reference(x, weight, bias)
    assert out.shape == (B, FEATURES, H, W), out.shape
    assert jnp.allclose(out, ref, atol=2e-2, rtol=2e-2), "eval-mode mismatch vs reference"

    # Training-mode forward (fused inverted dropout). The mask is deterministic
    # given the key, so check the kept/dropped pattern and values exactly.
    out_tr = jax.block_until_ready(
        conv_forward(x, weight, bias, rate=DROPOUT, training=True, rng_key=k_drop))
    assert out_tr.shape == (B, FEATURES, H, W)
    bits = jax.random.bits(k_drop, (B, FEATURES, H * W), jnp.uint32)
    keep = (bits < jnp.uint32(int(round((1.0 - DROPOUT) * 4294967296.0)))).reshape(
        B, FEATURES, H, W)
    expected = jnp.where(keep, ref / (1.0 - DROPOUT), 0.0)
    assert jnp.allclose(out_tr, expected, atol=3e-2, rtol=3e-2), "training-mode mismatch"

    print("KERNEL_OK")
</pallas_src>

<mosaic_0001>
module attributes {stable_mosaic.version = 11 : i64} {
  func.func @_conv1x1_relu_kernel(%arg0: i32, %arg1: memref<1x32x256xbf16, #tpu.memory_space<vmem>>, %arg2: memref<32x32xf32, #tpu.memory_space<vmem>>, %arg3: memref<32x1xf32, #tpu.memory_space<vmem>>, %arg4: memref<1x32x256xf32, #tpu.memory_space<vmem>>) attributes {dimension_semantics = [#tpu.dimension_semantics<parallel>], iteration_bounds = array<i64: 2>, scalar_prefetch = 0 : i64, scratch_operands = 0 : i64, tpu.core_type = #tpu.core_type<tc>, window_params = [{transform_indices = @transform_0, window_bounds = array<i64: 1, 32, 256>}, {pipeline_mode = #tpu.pipeline_mode<synchronous>, transform_indices = @transform_1, window_bounds = array<i64: 32, 32>}, {pipeline_mode = #tpu.pipeline_mode<synchronous>, transform_indices = @transform_2, window_bounds = array<i64: 32, 1>}, {transform_indices = @transform_3, window_bounds = array<i64: 1, 32, 256>}]} {
    %c0 = arith.constant 0 : index
    %c0_0 = arith.constant 0 : index
    %0 = vector.load %arg2[%c0, %c0_0] : memref<32x32xf32, #tpu.memory_space<vmem>>, vector<32x32xf32>
    %1 = arith.truncf %0 : vector<32x32xf32> to vector<32x32xbf16>
    %c0_1 = arith.constant 0 : index
    %c0_2 = arith.constant 0 : index
    %c0_3 = arith.constant 0 : index
    %2 = vector.load %arg1[%c0_1, %c0_2, %c0_3] : memref<1x32x256xbf16, #tpu.memory_space<vmem>>, vector<1x32x256xbf16>
    %3 = vector.shape_cast %2 : vector<1x32x256xbf16> to vector<32x256xbf16>
    %cst = arith.constant dense<0.000000e+00> : vector<32x256xf32>
    %4 = tpu.matmul %1, %3, %cst {dimension_numbers = #tpu.dot_dimension_numbers<[1], [0], [0], [1], [0, 0, 1, 1], [], []>} : vector<32x32xbf16>, vector<32x256xbf16>, vector<32x256xf32> -> vector<32x256xf32>
    %c0_4 = arith.constant 0 : index
    %c0_5 = arith.constant 0 : index
    %5 = vector.load %arg3[%c0_4, %c0_5] : memref<32x1xf32, #tpu.memory_space<vmem>>, vector<32x1xf32>
    %6 = vector.broadcast %5 : vector<32x1xf32> to vector<32x256xf32>
    %7 = arith.addf %4, %6 : vector<32x256xf32>
    %cst_6 = arith.constant 0.000000e+00 : f32
    %8 = vector.broadcast %cst_6 : f32 to vector<32x256xf32>
    %9 = arith.maximumf %7, %8 : vector<32x256xf32>
    %c0_7 = arith.constant 0 : index
    %c0_8 = arith.constant 0 : index
    %c0_9 = arith.constant 0 : index
    %10 = vector.load %arg4[%c0_7, %c0_8, %c0_9] : memref<1x32x256xf32, #tpu.memory_space<vmem>>, vector<1x32x256xf32>
    %11 = vector.shape_cast %10 : vector<1x32x256xf32> to vector<32x256xf32>
    %12 = vector.shape_cast %9 : vector<32x256xf32> to vector<1x32x256xf32>
    tpu.vector_store %arg4[%c0_7, %c0_8, %c0_9], %12 {strides = array<i32>} : memref<1x32x256xf32, #tpu.memory_space<vmem>>, vector<1x32x256xf32>,
    return
  }
  func.func @transform_0(%arg0: i32) -> (i32, i32, i32) {
    %c0_i32 = arith.constant 0 : i32
    %c0_i32_0 = arith.constant 0 : i32
    %c0_i32_1 = arith.constant 0 : i32
    return %arg0, %c0_i32, %c0_i32_0 : i32, i32, i32
  }
  func.func @transform_1(%arg0: i32) -> (i32, i32) {
    %c0_i32 = arith.constant 0 : i32
    %c0_i32_0 = arith.constant 0 : i32
    %c0_i32_1 = arith.constant 0 : i32
    return %c0_i32, %c0_i32_0 : i32, i32
  }
  func.func @transform_2(%arg0: i32) -> (i32, i32) {
    %c0_i32 = arith.constant 0 : i32
    %c0_i32_0 = arith.constant 0 : i32
    %c0_i32_1 = arith.constant 0 : i32
    return %c0_i32, %c0_i32_0 : i32, i32
  }
  func.func @transform_3(%arg0: i32) -> (i32, i32, i32) {
    %c0_i32 = arith.constant 0 : i32
    %c0_i32_0 = arith.constant 0 : i32
    %c0_i32_1 = arith.constant 0 : i32
    return %arg0, %c0_i32, %c0_i32_0 : i32, i32, i32
  }
}

</mosaic_0001>

<llo_original>
// kernel: tpu_custom_call.1
$region0: #{tpu_custom_call.1}
  #allocation0 [shape = 'u32[]', space=smem, size = 0x4, offset = 0x4, fixed_abs, tag = 'smem constant byte address 0x4 - core index']
  #allocation1 [shape = 'u32[144,128]{1,0:T(1,128)}', space=vmem, size = 0x12000, scoped, tag = 'internal scratch']
  %s0 = inlined_call_operand.hbm [shape: bf16[2,32,256], index: 0, kind: input, shape index: {}]
  %s1 = inlined_call_operand.vmem [shape: f32[32,32], index: 1, kind: input, shape index: {}]
  %s2 = inlined_call_operand.vmem [shape: f32[32,1], index: 2, kind: input, shape index: {}]
  %s3 = inlined_call_operand.hbm [shape: f32[2,32,256], index: 3, kind: output, shape index: {}]
  %s4 = sld [smem:[#allocation0]]
  $region49: #{tpu_custom_call.1} parent=0
    _
  %s6 = ssub.s32 1, %s4
  %s7 = scalar_select 0, %s6, %s4
  $region1: #{tpu_custom_call.1} parent=0
    #allocation2 [shape = 'u8[32768]{0}', space=vmem, size = 0x8000, scoped, tag = 'input window, operand 0']
    #allocation3 [shape = 's32[2]{0}', space=sflag, size = 0x8, scoped, tag = 'scoped memory for tpu_custom_call.1']
    #allocation4 [shape = 's32[2]{0}', space=sflag, size = 0x8, scoped, tag = 'scoped memory for tpu_custom_call.1']
    #allocation5 [shape = 'u8[65536]{0}', space=vmem, size = 0x10000, scoped, tag = 'output window, operand 0']
    %8 = vsyncpa [#allocation3], 0
    %s9 = scalar_lea.sflag [#allocation3], 1
    %10 = vsyncpa %s9, 0
    %11 = vsyncpa [#allocation4], 0
    %s12 = scalar_lea.sflag [#allocation4], 1
    %13 = vsyncpa %s12, 0
    loop: start=0, step=1, limit=4
    $region2: #{tpu_custom_call.1} parent=1 // loop_pre_header
      _
    $region3: #{tpu_custom_call.1} parent=1 // loop_header
      %s15 = sphi 0, %s19
      %p16 = scmp.ge.s32.totalorder %s15, 4
      %s25 = sphi 0, %s27
      %s28 = sphi 0, %s25
      %s29 = sphi 0, %s28
      %s45 = sphi 0, %s29
      %s49 = sphi 0, %s49
      %s51 = sphi 0, %s49
      %s52 = sphi 0, %s51
      %s66 = sphi 0, %s52
      %s70 = sphi 0, %s70
      %s72 = sphi 0, %s70
      %s73 = sphi 0, %s72
      %s87 = sphi 0, %s73
      %s93 = sphi 0, %s95
      %s96 = sphi 0, %s93
      %s97 = sphi 0, %s96
      %s113 = sphi 0, %s97
    $region4: #{tpu_custom_call.1} parent=1 // loop_header_branch
      %18 = sbr.rel (%p16) target = $region8
    $region5: #{tpu_custom_call.1} parent=1 // loop_body
      %s20 = ssub.s32 %s15, 1
      %s21 = ssub.s32 %s15, 2
      %s22 = sadd.s32 %s15, 1
      %s23 = ssub.s32 %s15, %s22
      %p24 = scmp.eq.s32.totalorder %s23, 0
      %s26 = sadd.s32 %s25, 1
      %s27 = scalar_select %p24, %s25, %s26
      %p30 = pneg %p24
      %p31 = scmp.eq.s32.totalorder %s15, 1
      %p32 = por %p30, %p31
      %p33 = scmp.ne.s32.totalorder %s25, %s28
      %p34 = scmp.eq.s32.totalorder %s15, 0
      %p35 = por %p33, %p34
      %p36 = scmp.ne.s32.totalorder %s25, %s28
      %p37 = scmp.eq.s32.totalorder %s20, 1
      %p38 = por %p36, %p37
      %p39 = scmp.ne.s32.totalorder %s28, %s29
      %p40 = scmp.eq.s32.totalorder %s20, 0
      %p41 = por %p39, %p40
      %p42 = scmp.ne.s32.totalorder %s28, %s29
      %p43 = scmp.eq.s32.totalorder %s21, 1
      %p44 = por %p42, %p43
      %p46 = scmp.ne.s32.totalorder %s29, %s45
      %p47 = scmp.eq.s32.totalorder %s21, 0
      %p48 = por %p46, %p47
      %s50 = sadd.s32 %s49, 1
      %p53 = scmp.eq.s32.totalorder %s15, 1
      %p54 = scmp.ne.s32.totalorder %s49, %s51
      %p55 = scmp.eq.s32.totalorder %s15, 0
      %p56 = por %p54, %p55
      %p57 = scmp.ne.s32.totalorder %s49, %s51
      %p58 = scmp.eq.s32.totalorder %s20, 1
      %p59 = por %p57, %p58
      %p60 = scmp.ne.s32.totalorder %s51, %s52
      %p61 = scmp.eq.s32.totalorder %s20, 0
      %p62 = por %p60, %p61
      %p63 = scmp.ne.s32.totalorder %s51, %s52
      %p64 = scmp.eq.s32.totalorder %s21, 1
      %p65 = por %p63, %p64
      %p67 = scmp.ne.s32.totalorder %s52, %s66
      %p68 = scmp.eq.s32.totalorder %s21, 0
      %p69 = por %p67, %p68
      %s71 = sadd.s32 %s70, 1
      %p74 = scmp.eq.s32.totalorder %s15, 1
      %p75 = scmp.ne.s32.totalorder %s70, %s72
      %p76 = scmp.eq.s32.totalorder %s15, 0
      %p77 = por %p75, %p76
      %p78 = scmp.ne.s32.totalorder %s70, %s72
      %p79 = scmp.eq.s32.totalorder %s20, 1
      %p80 = por %p78, %p79
      %p81 = scmp.ne.s32.totalorder %s72, %s73
      %p82 = scmp.eq.s32.totalorder %s20, 0
      %p83 = por %p81, %p82
      %p84 = scmp.ne.s32.totalorder %s72, %s73
      %p85 = scmp.eq.s32.totalorder %s21, 1
      %p86 = por %p84, %p85
      %p88 = scmp.ne.s32.totalorder %s73, %s87
      %p89 = scmp.eq.s32.totalorder %s21, 0
      %p90 = por %p88, %p89
      %s91 = ssub.s32 %s15, %s22
      %p92 = scmp.eq.s32.totalorder %s91, 0
      %s94 = sadd.s32 %s93, 1
      %s95 = scalar_select %p92, %s93, %s94
      %p98 = pneg %p92
      %p99 = scmp.eq.s32.totalorder %s15, 1
      %p100 = por %p98, %p99
      %p101 = scmp.ne.s32.totalorder %s93, %s96
      %p102 = scmp.eq.s32.totalorder %s15, 0
      %p103 = por %p101, %p102
      %p104 = scmp.ne.s32.totalorder %s93, %s96
      %p105 = scmp.eq.s32.totalorder %s20, 1
      %p106 = por %p104, %p105
      %p107 = scmp.ne.s32.totalorder %s96, %s97
      %p108 = scmp.eq.s32.totalorder %s20, 0
      %p109 = por %p107, %p108
      %p110 = scmp.ne.s32.totalorder %s96, %s97
      %p111 = scmp.eq.s32.totalorder %s21, 1
      %p112 = por %p110, %p111
      %p114 = scmp.ne.s32.totalorder %s97, %s113
      %p115 = scmp.eq.s32.totalorder %s21, 0
      %p116 = por %p114, %p115
      %p117 = scmp.le.s32.totalorder 1, %s15
      %p118 = scmp.lt.s32.totalorder %s15, 3
      %p119 = pnand %p117, %p118
      %p120 = pneg %p119
      // Predicated region
      $region9: #{tpu_custom_call.1} parent=5 // pred_check
        _
      $region10: #{tpu_custom_call.1} parent=5 // pred_check_branch
        %122 = sbr.rel (%p119) target = $region12
      $region11: #{tpu_custom_call.1} parent=5 // pred_region
        %s123 = ssub.s32 %s15, 1
        // Predicated region
        $region13: #{tpu_custom_call.1} parent=11 // pred_check
          %p124 = pneg %p62
        $region14: #{tpu_custom_call.1} parent=11 // pred_check_branch
          %126 = sbr.rel (%p124) target = $region16
        $region15: #{tpu_custom_call.1} parent=11 // pred_region
          _
        $region16: #{tpu_custom_call.1} parent=11 // pred_fallthru
          _
        // Predicated region
        $region17: #{tpu_custom_call.1} parent=11 // pred_check
          %p127 = pneg %p83
        $region18: #{tpu_custom_call.1} parent=11 // pred_check_branch
          %129 = sbr.rel (%p127) target = $region20
        $region19: #{tpu_custom_call.1} parent=11 // pred_region
          _
        $region20: #{tpu_custom_call.1} parent=11 // pred_fallthru
          _
      $region12: #{tpu_custom_call.1} parent=5 // pred_fallthru
        _
      %p130 = scmp.lt.s32.totalorder %s15, 2
      // Predicated region
      $region21: #{tpu_custom_call.1} parent=5 // pred_check
        %p131 = pneg %p130
      $region22: #{tpu_custom_call.1} parent=5 // pred_check_branch
        %133 = sbr.rel (%p131) target = $region24
      $region23: #{tpu_custom_call.1} parent=5 // pred_region
        // Predicated region
        $region25: #{tpu_custom_call.1} parent=23 // pred_check
          %p134 = pneg %p35
        $region26: #{tpu_custom_call.1} parent=23 // pred_check_branch
          %136 = sbr.rel (%p134) target = $region28
        $region27: #{tpu_custom_call.1} parent=23 // pred_region
          %s137 = sand.u32 %s25, 1
          %s138 = scalar_lea.sflag [#allocation3], %s137
          %s139 = sand.u32 %s25, 1
          %s140 = smul.addr %s139, 32
          %s141 = scalar_lea.vmem [#allocation2], %s140
          %s143 = ssub.s32 512, 512
          %144 = vsyncadd %s138, %s143
          %s145 = smul.addr %s15, 8
          %s146 = smul.addr %s145, 64
          %s147 = scalar_lea.hbm %s0, %s146
          %s148 = sshll.u32 %s141, 4
          %s149 = int_to_ptr.vmem [resolvable:$true] %s148
          %154 = dma.hbm_to_vmem [thread:$0]  %s147, 512, %s149, %s138, 128, 128, 8
        $region28: #{tpu_custom_call.1} parent=23 // pred_fallthru
          _
      $region24: #{tpu_custom_call.1} parent=5 // pred_fallthru
        _
      %p155 = scmp.le.s32.totalorder 1, %s15
      %p156 = scmp.lt.s32.totalorder %s15, 3
      %p157 = pnand %p155, %p156
      %p158 = pneg %p157
      // Predicated region
      $region29: #{tpu_custom_call.1} parent=5 // pred_check
        _
      $region30: #{tpu_custom_call.1} parent=5 // pred_check_branch
        %160 = sbr.rel (%p157) target = $region32
      $region31: #{tpu_custom_call.1} parent=5 // pred_region
        %s161 = ssub.s32 %s15, 1
        %s162 = sand.u32 %s28, 1
        %s163 = scalar_lea.sflag [#allocation3], %s162
        %s164 = sand.u32 %s28, 1
        %s165 = smul.addr %s164, 32
        %s166 = scalar_lea.vmem [#allocation2], %s165
        // Predicated region
        $region33: #{tpu_custom_call.1} parent=31 // pred_check
          %p167 = pneg %p41
        $region34: #{tpu_custom_call.1} parent=31 // pred_check_branch
          %169 = sbr.rel (%p167) target = $region36
        $region35: #{tpu_custom_call.1} parent=31 // pred_region
          %170 = dma.done %s163, 512
        $region36: #{tpu_custom_call.1} parent=31 // pred_fallthru
          _
        %s171 = sand.u32 %s28, 1
        %s172 = scalar_lea.sflag [#allocation3], %s171
        %s173 = sand.u32 %s28, 1
        %s174 = smul.addr %s173, 32
        %s175 = scalar_lea.vmem [#allocation2], %s174
        %p176 = pneg %p41
        %p177 = pneg %p38
        %p178 = pneg %p62
        %p179 = pneg %p59
        %p180 = pneg %p83
        %p181 = pneg %p80
        %p182 = pneg %p109
        %p183 = pneg %p106
        %s184 = sand.u32 %s96, 1
        %s185 = scalar_lea.sflag [#allocation4], %s184
        %s186 = sand.u32 %s96, 1
        %s187 = smul.addr %s186, 64
        %s188 = scalar_lea.vmem [#allocation5], %s187
        %v190 = vld [vmem:[%s1] sm:$0xff]
        %v191 = vld [vmem:[%s1 + $0x8] sm:$0xff]
        %v192 = vld [vmem:[%s1 + $0x10] sm:$0xff]
        %v193 = vld [vmem:[%s1 + $0x18] sm:$0xff]
        %v194 = vpack.c.bf16 %v191, %v190
        %v195 = vpack.c.bf16 %v193, %v192
        %v196 = vld [vmem:[%s166] sm:$0xff]
        %v197 = vld [vmem:[%s166 + $0x8] sm:$0xff]
        %v198 = vld [vmem:[%s166 + $0x10] sm:$0xff]
        %v199 = vld [vmem:[%s166 + $0x18] sm:$0xff]
        %v200 = vld [vmem:[%s2] sm:$0xff]
        %v201 = vld [vmem:[%s2 + $0x8] sm:$0xff]
        %v202 = vld [vmem:[%s2 + $0x10] sm:$0xff]
        %v203 = vld [vmem:[%s2 + $0x18] sm:$0xff]
        %205 = vset.pattern.permute.xlu0 0
        %206 = vperm.xlu0 %205, %v200
        %v207 = vpop.permute.xlu0 %206
        %210 = vset.pattern.permute.xlu0 0
        %211 = vperm.xlu0 %210, %v201
        %v212 = vpop.permute.xlu0 %211
        %215 = vset.pattern.permute.xlu0 0
        %216 = vperm.xlu0 %215, %v202
        %v217 = vpop.permute.xlu0 %216
        %220 = vset.pattern.permute.xlu0 0
        %221 = vperm.xlu0 %220, %v203
        %v222 = vpop.permute.xlu0 %221
        %v228 = vunpack.c.l.b16 %v196
        %v229 = vunpack.c.h.b16 %v196
        %v230 = vunpack.c.l.b16 %v197
        %v231 = vunpack.c.h.b16 %v197
        %v232 = vunpack.c.l.b16 %v198
        %v233 = vunpack.c.h.b16 %v198
        %v234 = vunpack.c.l.b16 %v199
        %v235 = vunpack.c.h.b16 %v199
        %v236 = vpack.c.b16 %v230, %v228
        %v237 = vpack.c.b16 %v231, %v229
        %v238 = vpack.c.b16 %v234, %v232
        %v239 = vpack.c.b16 %v235, %v233
        %vm244 = vcmask 261120
        %v246 = vsel %vm244, %v194, 0
        %v249 = vsel %vm244, %v195, 0
        %251 = vmatprep.subr.bf16.mxu0 %v237
        %252 = vmatpush1.bf16.msra.mxu0 %v236
        %253 = vmatprep.subr.bf16.mxu0 %v239
        %254 = vmatpush1.bf16.msra.mxu0 %v238
        %255 = vmatprep.subr.bf16.mxu0 0
        %256 = vmatpush1.bf16.msra.mxu0 0
        %257 = vmatprep.subr.bf16.mxu0 0
        %258 = vmatpush1.bf16.msra.mxu0 0
        %259 = vmatprep.subr.bf16.mxu0 0
        %260 = vmatpush1.bf16.msra.mxu0 0
        %261 = vmatprep.subr.bf16.mxu0 0
        %262 = vmatpush1.bf16.msra.mxu0 0
        %263 = vmatprep.subr.bf16.mxu0 0
        %264 = vmatpush1.bf16.msra.mxu0 0
        %265 = vmatprep.subr.bf16.mxu0 0
        %266 = vmatpush1.bf16.msra.mxu0 0
        %267 = vmatprep.subr.bf16.mxu0 0
        %268 = vmatpush1.bf16.msra.mxu0 0
        %269 = vmatprep.subr.bf16.mxu0 0
        %270 = vmatpush1.bf16.msra.mxu0 0
        %271 = vmatprep.subr.bf16.mxu0 0
        %272 = vmatpush1.bf16.msra.mxu0 0
        %273 = vmatprep.subr.bf16.mxu0 0
        %274 = vmatpush1.bf16.msra.mxu0 0
        %275 = vmatprep.subr.bf16.mxu0 0
        %276 = vmatpush1.bf16.msra.mxu0 0
        %277 = vmatprep.subr.bf16.mxu0 0
        %278 = vmatpush1.bf16.msra.mxu0 0
        %279 = vmatprep.subr.bf16.mxu0 0
        %280 = vmatpush1.bf16.msra.mxu0 0
        %281 = vmatprep.subr.bf16.mxu0 0
        %282 = vmatpush1.bf16.msra.mxu0 0
        %283 = vmatprep.mubr.bf16.mxu0 0
        %284 = vmatmul.mubr.bf16.gmra.mrb[0].mxu0 %v246
        %v285 = vpop.f32.mrb[0].mxu0
        %v286 = vadd.f32 %v207, %v285
        %v287 = vpop.f32.mrb[0].mxu0
        %v288 = vadd.f32 %v207, %v287
        %v289 = vpop.f32.mrb[0].mxu0
        %v290 = vadd.f32 %v212, %v289
        %v291 = vpop.f32.mrb[0].mxu0
        %v292 = vadd.f32 %v212, %v291
        %293 = vmatprep.mubr.bf16.mxu0 0
        %294 = vmatmul.mubr.bf16.gmra.mrb[0].mxu0 %v249
        %v295 = vpop.f32.mrb[0].mxu0
        %v296 = vadd.f32 %v217, %v295
        %v297 = vpop.f32.mrb[0].mxu0
        %v298 = vadd.f32 %v217, %v297
        %v299 = vpop.f32.mrb[0].mxu0
        %v300 = vadd.f32 %v222, %v299
        %v301 = vpop.f32.mrb[0].mxu0
        %v302 = vadd.f32 %v222, %v301
        %303 = vdwg.mxu0
        %v304 = vmax.f32 %v286, 0.0
        %v305 = vmax.f32 %v288, 0.0
        %v306 = vmax.f32 %v290, 0.0
        %v307 = vmax.f32 %v292, 0.0
        %v308 = vmax.f32 %v296, 0.0
        %v309 = vmax.f32 %v298, 0.0
        %v310 = vmax.f32 %v300, 0.0
        %v311 = vmax.f32 %v302, 0.0
        %312 = vst [vmem:[%s188] sm:$0xff] %v304
        %313 = vst [vmem:[%s188 + $0x8] sm:$0xff] %v305
        %314 = vst [vmem:[%s188 + $0x10] sm:$0xff] %v306
        %315 = vst [vmem:[%s188 + $0x18] sm:$0xff] %v307
        %316 = vst [vmem:[%s188 + $0x20] sm:$0xff] %v308
        %317 = vst [vmem:[%s188 + $0x28] sm:$0xff] %v309
        %318 = vst [vmem:[%s188 + $0x30] sm:$0xff] %v310
        %319 = vst [vmem:[%s188 + $0x38] sm:$0xff] %v311
        %s320 = sand.u32 %s96, 1
        %s321 = scalar_lea.sflag [#allocation4], %s320
        %s322 = sand.u32 %s96, 1
        %s323 = smul.addr %s322, 64
        %s324 = scalar_lea.vmem [#allocation5], %s323
        // Predicated region
        $region37: #{tpu_custom_call.1} parent=31 // pred_check
          %p325 = pneg %p106
        $region38: #{tpu_custom_call.1} parent=31 // pred_check_branch
          %327 = sbr.rel (%p325) target = $region40
        $region39: #{tpu_custom_call.1} parent=31 // pred_region
          %s329 = ssub.s32 1024, 1024
          %330 = vsyncadd %s321, %s329
          %s331 = smul.addr %s20, 8
          %s332 = smul.addr %s331, 128
          %s333 = scalar_lea.hbm %s3, %s332
          %s334 = sshll.u32 %s324, 4
          %s335 = int_to_ptr.vmem [resolvable:$true] %s334
          %340 = dma.vmem_to_hbm [thread:$0]  %s335, 1024, %s333, %s321, 256, 256, 16
        $region40: #{tpu_custom_call.1} parent=31 // pred_fallthru
          _
      $region32: #{tpu_custom_call.1} parent=5 // pred_fallthru
        _
      %p341 = scmp.le.s32.totalorder 2, %s15
      // Predicated region
      $region41: #{tpu_custom_call.1} parent=5 // pred_check
        %p342 = pneg %p341
      $region42: #{tpu_custom_call.1} parent=5 // pred_check_branch
        %344 = sbr.rel (%p342) target = $region44
      $region43: #{tpu_custom_call.1} parent=5 // pred_region
        %s345 = ssub.s32 %s15, 2
        // Predicated region
        $region45: #{tpu_custom_call.1} parent=43 // pred_check
          %p346 = pneg %p112
        $region46: #{tpu_custom_call.1} parent=43 // pred_check_branch
          %348 = sbr.rel (%p346) target = $region48
        $region47: #{tpu_custom_call.1} parent=43 // pred_region
          %s349 = sand.u32 %s97, 1
          %s350 = scalar_lea.sflag [#allocation4], %s349
          %s351 = sand.u32 %s97, 1
          %s352 = smul.addr %s351, 64
          %s353 = scalar_lea.vmem [#allocation5], %s352
          %354 = dma.done %s350, 1024
        $region48: #{tpu_custom_call.1} parent=43 // pred_fallthru
          _
      $region44: #{tpu_custom_call.1} parent=5 // pred_fallthru
        _
    $region6: #{tpu_custom_call.1} parent=1 // loop_footer
      %s19 = sadd.s32 1, %s15
    $region7: #{tpu_custom_call.1} parent=1 // loop_footer_branch
      %14 = sbr.rel target = $region3
    $region8: #{tpu_custom_call.1} parent=1 // loop_exit
      _
    %355 = vsyncpa [#allocation3], 1
    %s356 = scalar_lea.sflag [#allocation3], 1
    %357 = vsyncpa %s356, 1
    %358 = vsyncpa [#allocation4], 1
    %s359 = scalar_lea.sflag [#allocation4], 1
    %360 = vsyncpa %s359, 1

</llo_original>
